<compile_context>
chip_gen: v7x
topology: tpu7x:2x2x1
jax: 0.10.0
libtpu: 0.0.40
codegen_flags: <defaults>
</compile_context>

<pallas_src>
import functools
import math

import jax
import jax.numpy as jnp
from jax.experimental import pallas as pl
from jax.experimental.pallas import tpu as pltpu


# ------------------------------ tiling helper -------------------------------

def _pick_tile(dim, cap, multiple=128):
    """Largest tile <= cap that evenly divides dim, preferring 128-multiples.

    Avoids the old full-dim fallback (which silently blew tiles up to e.g.
    2304 lanes and ate the VMEM pipelining headroom, esp. on v7x's 64 MiB).
    """
    if dim <= cap:
        return dim
    # multiples of `multiple` first (lane/MXU friendly), then multiples of 8,
    # then any divisor.
    t = (cap // multiple) * multiple
    while t >= multiple:
        if dim % t == 0:
            return t
        t -= multiple
    t = (cap // 8) * 8
    while t >= 8:
        if dim % t == 0:
            return t
        t -= 8
    for t in range(cap, 0, -1):
        if dim % t == 0:
            return t
    return dim


# -------------------- linear (weight-stationary, +GELU) ----------------------

def _linear_kernel(x_ref, w_ref, b_ref, o_ref, *, activation):
    y = jnp.dot(x_ref[...], w_ref[...], preferred_element_type=jnp.float32)
    y = y + b_ref[...]
    if activation == "gelu":
        # TODO(synk): PyTorch BERT default is exact erf-GELU; tanh approx used
        # here (standard BERT intermediate act, small numeric difference).
        y = jax.nn.gelu(y, approximate=True)
    o_ref[...] = y.astype(o_ref.dtype)


def linear(x, w, b, activation=None, *, out_dtype=jnp.bfloat16,
           tm=512, tn=1024):
    """x: [M, K], w: [K, N], b: [N] -> [M, N].

    Full-K weight block; grid is (N/tn, M/tm) with the weight block on the
    OUTER axis so each weight column block is fetched from HBM once (weight
    traffic == weight size, instead of M/tm re-streams).
    """
    M, K = x.shape
    N = w.shape[1]
    tm = _pick_tile(M, tm, multiple=8)
    tn = _pick_tile(N, tn, multiple=128)
    x = x.astype(jnp.bfloat16)
    w = w.astype(jnp.bfloat16)
    b = b.astype(jnp.float32).reshape(1, N)
    kernel = functools.partial(_linear_kernel, activation=activation)
    return pl.pallas_call(
        kernel,
        out_shape=jax.ShapeDtypeStruct((M, N), out_dtype),
        grid_spec=pltpu.PrefetchScalarGridSpec(
            num_scalar_prefetch=0,
            grid=(N // tn, M // tm),                 # weight block outer
            in_specs=[
                pl.BlockSpec((tm, K), lambda j, i: (i, 0)),
                pl.BlockSpec((K, tn), lambda j, i: (0, j)),   # resident per j
                pl.BlockSpec((1, tn), lambda j, i: (0, j)),
            ],
            out_specs=pl.BlockSpec((tm, tn), lambda j, i: (i, j)),
        ),
        compiler_params=pltpu.CompilerParams(
            dimension_semantics=("parallel", "parallel")),
    )(x, w, b)


# --------------------------- layernorm (+residual) ---------------------------

def _layernorm_kernel(x_ref, *rest, eps, has_residual):
    if has_residual:
        r_ref, g_ref, b_ref, o_ref = rest
    else:
        g_ref, b_ref, o_ref = rest
    x = x_ref[...].astype(jnp.float32)
    if has_residual:
        x = x + r_ref[...].astype(jnp.float32)
    mu = jnp.mean(x, axis=-1, keepdims=True)
    var = jnp.mean(jnp.square(x - mu), axis=-1, keepdims=True)
    y = (x - mu) * jax.lax.rsqrt(var + eps)
    o_ref[...] = (y * g_ref[...] + b_ref[...]).astype(o_ref.dtype)


def layernorm(x, gamma, beta, residual=None, *, eps=1e-12,
              out_dtype=jnp.bfloat16, tm=512):
    """LN(x [+ residual]); x/residual: [M, D], gamma/beta: [D] -> [M, D]."""
    M, D = x.shape
    tm = _pick_tile(M, tm, multiple=8)
    g = gamma.astype(jnp.float32).reshape(1, D)
    bt = beta.astype(jnp.float32).reshape(1, D)
    has_residual = residual is not None
    kernel = functools.partial(_layernorm_kernel, eps=eps,
                               has_residual=has_residual)
    row_spec = pl.BlockSpec((tm, D), lambda i: (i, 0))
    vec_spec = pl.BlockSpec((1, D), lambda i: (0, 0))
    in_specs = [row_spec] + ([row_spec] if has_residual else []) \
               + [vec_spec, vec_spec]
    args = [x] + ([residual] if has_residual else []) + [g, bt]
    return pl.pallas_call(
        kernel,
        out_shape=jax.ShapeDtypeStruct((M, D), out_dtype),
        grid_spec=pltpu.PrefetchScalarGridSpec(
            num_scalar_prefetch=0,
            grid=(M // tm,),
            in_specs=in_specs,
            out_specs=row_spec,
        ),
        compiler_params=pltpu.CompilerParams(
            dimension_semantics=("parallel",)),
    )(*args)


# ----------------- embedding sum fused into embedding layernorm --------------

def _embed_ln_kernel(tok_ref, typ_ref, pos_ref, g_ref, b_ref, o_ref, *, eps):
    x = (tok_ref[...].astype(jnp.float32)
         + typ_ref[...].astype(jnp.float32)
         + pos_ref[...].astype(jnp.float32))
    mu = jnp.mean(x, axis=-1, keepdims=True)
    var = jnp.mean(jnp.square(x - mu), axis=-1, keepdims=True)
    y = (x - mu) * jax.lax.rsqrt(var + eps)
    o_ref[...] = (y * g_ref[...] + b_ref[...]).astype(o_ref.dtype)


def embed_layernorm(tok_e, typ_e, pos_e, gamma, beta, *, eps=1e-12,
                    out_dtype=jnp.bfloat16, ts=512):
    """LN(tok_e + typ_e + pos); tok/typ: [B*S, D], pos: [S, D] -> [B*S, D]."""
    BS, D = tok_e.shape
    S = pos_e.shape[0]
    B = BS // S
    ts = _pick_tile(S, ts, multiple=8)
    n_s = S // ts
    g = gamma.astype(jnp.float32).reshape(1, D)
    bt = beta.astype(jnp.float32).reshape(1, D)
    row_spec = pl.BlockSpec((ts, D), lambda b, s: (b * n_s + s, 0))
    pos_spec = pl.BlockSpec((ts, D), lambda b, s: (s, 0))
    vec_spec = pl.BlockSpec((1, D), lambda b, s: (0, 0))
    return pl.pallas_call(
        functools.partial(_embed_ln_kernel, eps=eps),
        out_shape=jax.ShapeDtypeStruct((BS, D), out_dtype),
        grid_spec=pltpu.PrefetchScalarGridSpec(
            num_scalar_prefetch=0,
            grid=(B, n_s),
            in_specs=[row_spec, row_spec, pos_spec, vec_spec, vec_spec],
            out_specs=row_spec,
        ),
        compiler_params=pltpu.CompilerParams(
            dimension_semantics=("parallel", "parallel")),
    )(tok_e, typ_e, pos_e, g, bt)


# -------------------- attention (single-pass, fused QKV I/O) ------------------

def _attn_kernel(q_ref, k_ref, v_ref, mask_ref, o_ref, *,
                 scale, is_causal, dh, g, tq):
    S = k_ref.shape[0]
    # padding bias built in-kernel from the tiny [B,1,S] validity mask
    bias = (mask_ref[0] - 1.0) * 1e9                         # (1, S) f32
    # apply softmax scale to Q (tq x g*dh elems) instead of to scores (tq x S)
    qs = (q_ref[...].astype(jnp.float32) * scale).astype(jnp.bfloat16)
    outs = []
    for h in range(g):                                       # static unroll
        q = qs[:, h * dh:(h + 1) * dh]                       # (tq, dh)  bf16
        k = k_ref[:, h * dh:(h + 1) * dh]                    # (S,  dh)  bf16
        v = v_ref[:, h * dh:(h + 1) * dh]                    # (S,  dh)  bf16
        s = jax.lax.dot_general(
            q, k, (((1,), (1,)), ((), ())),
            preferred_element_type=jnp.float32)              # (tq, S) f32
        s = s + bias
        if is_causal:
            q_pos = (pl.program_id(2) * tq
                     + jax.lax.broadcasted_iota(jnp.int32, (tq, S), 0))
            k_pos = jax.lax.broadcasted_iota(jnp.int32, (tq, S), 1)
            s = jnp.where(q_pos >= k_pos, s, -1e30)
        m = jnp.max(s, axis=-1, keepdims=True)
        p = jnp.exp(s - m)                                   # single pass
        l = jnp.sum(p, axis=-1, keepdims=True)
        ctx = jnp.dot(p.astype(v.dtype), v,
                      preferred_element_type=jnp.float32)    # (tq, dh) f32
        outs.append(ctx * pl.reciprocal(l, approx=True))
    # one lane-dense (tq, g*dh >= 128) store
    o_ref[...] = jnp.concatenate(outs, axis=-1).astype(o_ref.dtype)


def attention_fused(qkv, mask_b, scale, is_causal=False, *, n_heads, d_model,
                    out_dtype=jnp.bfloat16, tq_cap=256):
    """Attention directly on the fused QKV matmul output.

    qkv: [B*S, 3*D] bf16 (columns = [Q | K | V], heads contiguous inside each D)
    mask_b: [B, 1, S] f32 (1 valid / 0 pad)
    returns ctx in merged [B*S, D] layout (no head split/merge transposes).
    """
    BS, _ = qkv.shape
    D = d_model
    Dh = D // n_heads
    B = mask_b.shape[0]
    S = mask_b.shape[2]

    # group g heads per grid step so the lane width g*Dh is a 128-multiple
    g = None
    for cand in range(1, n_heads + 1):
        if n_heads % cand == 0 and (cand * Dh) % 128 == 0:
            g = cand
            break
    # TODO(synk): no head grouping gives a 128-multiple lane width for this
    # (n_heads, Dh); would need an XLA Q/K/V slice fallback.
    assert g is not None, f"no head group with g*Dh % 128 == 0 (Dh={Dh})"
    gw = g * Dh
    n_hp = n_heads // g
    tq = _pick_tile(S, tq_cap, multiple=8)
    n_q = S // tq

    kernel = functools.partial(_attn_kernel, scale=scale, is_causal=is_causal,
                               dh=Dh, g=g, tq=tq)
    q_spec = pl.BlockSpec((tq, gw), lambda b, hp, qi: (b * n_q + qi, hp))
    k_spec = pl.BlockSpec((S, gw), lambda b, hp, qi: (b, n_hp + hp))
    v_spec = pl.BlockSpec((S, gw), lambda b, hp, qi: (b, 2 * n_hp + hp))
    m_spec = pl.BlockSpec((1, 1, S), lambda b, hp, qi: (b, 0, 0))
    o_spec = pl.BlockSpec((tq, gw), lambda b, hp, qi: (b * n_q + qi, hp))

    return pl.pallas_call(
        kernel,
        out_shape=jax.ShapeDtypeStruct((BS, D), out_dtype),
        grid_spec=pltpu.PrefetchScalarGridSpec(
            num_scalar_prefetch=0,
            grid=(B, n_hp, n_q),
            in_specs=[q_spec, k_spec, v_spec, m_spec],
            out_specs=o_spec,
        ),
        compiler_params=pltpu.CompilerParams(
            dimension_semantics=("parallel", "parallel", "parallel")),
    )(qkv, qkv, qkv, mask_b.astype(jnp.float32))


# --------------------------- parameter creation ------------------------------

def make_params(key, *, vocab_size, type_vocab_size, max_pos, d_model,
                n_layers, n_heads, d_ff, num_classes=2):
    def nrm(k, shape, scale=0.02):
        return scale * jax.random.normal(k, shape, dtype=jnp.float32)

    keys = iter(jax.random.split(key, 8 + 6 * n_layers))
    p = {
        "tok_emb": nrm(next(keys), (vocab_size, d_model)),
        "typ_emb": nrm(next(keys), (type_vocab_size, d_model)),
        "pos_emb": nrm(next(keys), (max_pos, d_model)),
        "emb_ln_g": jnp.ones((d_model,), jnp.float32),
        "emb_ln_b": jnp.zeros((d_model,), jnp.float32),
        "layers": [],
        # proj: nn.Linear(d_model, 2) -> start/end logits
        "proj_w": nrm(next(keys), (d_model, num_classes)),
        "proj_b": jnp.zeros((num_classes,), jnp.float32),
    }
    for _ in range(n_layers):
        p["layers"].append({
            "w_qkv": nrm(next(keys), (d_model, 3 * d_model)),
            "b_qkv": jnp.zeros((3 * d_model,), jnp.float32),
            "w_o": nrm(next(keys), (d_model, d_model)),
            "b_o": jnp.zeros((d_model,), jnp.float32),
            "ln1_g": jnp.ones((d_model,), jnp.float32),
            "ln1_b": jnp.zeros((d_model,), jnp.float32),
            "w_ff1": nrm(next(keys), (d_model, d_ff)),
            "b_ff1": jnp.zeros((d_ff,), jnp.float32),
            "w_ff2": nrm(next(keys), (d_ff, d_model)),
            "b_ff2": jnp.zeros((d_model,), jnp.float32),
            "ln2_g": jnp.ones((d_model,), jnp.float32),
            "ln2_b": jnp.zeros((d_model,), jnp.float32),
        })
    return p


# ------------------------------ forward pass ---------------------------------

def bert_qa_forward(params, input_ids, token_type_ids, attn_mask=None,
                    is_causal=False, *, n_heads):
    B, S = input_ids.shape
    D = params["tok_emb"].shape[1]
    Dh = D // n_heads
    scale = 1.0 / math.sqrt(Dh)

    # --- embeddings: gathers in XLA, sum fused into the embedding layernorm ---
    # TODO(synk): embedding gather has no clean tiled Pallas equivalent here;
    # done with jnp.take outside the kernels.
    tok_e = jnp.take(params["tok_emb"], input_ids.reshape(-1), axis=0)
    typ_e = jnp.take(params["typ_emb"], token_type_ids.reshape(-1), axis=0)
    pos_e = params["pos_emb"][:S]                                  # [S, D]
    h = embed_layernorm(tok_e, typ_e, pos_e,
                        params["emb_ln_g"], params["emb_ln_b"])    # [B*S, D] bf16

    # --- tiny [B, 1, S] validity mask; the -1e9 bias is built in-kernel ---
    if attn_mask is None:
        mask = jnp.ones((B, S), jnp.float32)
    else:
        mask = attn_mask.astype(jnp.float32)
    mask_b = mask[:, None, :]                                      # [B, 1, S]

    for lyr in params["layers"]:
        x = h                                                      # [B*S, D] bf16
        qkv = linear(x, lyr["w_qkv"], lyr["b_qkv"])                # [B*S, 3D] bf16
        # attention reads 2-head (128-lane) windows straight out of qkv and
        # writes the context back in merged [B*S, D] layout (no XLA transposes)
        ctx = attention_fused(qkv, mask_b, scale, is_causal,
                              n_heads=n_heads, d_model=D)          # [B*S, D]

        attn_out = linear(ctx, lyr["w_o"], lyr["b_o"])             # [B*S, D]
        h1 = layernorm(attn_out, lyr["ln1_g"], lyr["ln1_b"], residual=x)

        ff = linear(h1, lyr["w_ff1"], lyr["b_ff1"], activation="gelu")
        ff = linear(ff, lyr["w_ff2"], lyr["b_ff2"])
        h = layernorm(ff, lyr["ln2_g"], lyr["ln2_b"], residual=h1)

    # --- QA head: Linear(d_model, 2). Too narrow (2 lanes) for an efficient
    # Pallas store path; bf16 matmul with f32 accumulation, no f32 activation
    # copy of h. ---
    # TODO(synk): 2-wide projection stays in XLA.
    logits = jnp.dot(h, params["proj_w"].astype(jnp.bfloat16),
                     preferred_element_type=jnp.float32) + params["proj_b"]
    logits = logits.reshape(B, S, 2)
    start_logits = logits[:, :, 0]                                 # [B, S]
    end_logits = logits[:, :, 1]                                   # [B, S]
    return start_logits, end_logits


# --------------------------------- main ---------------------------------------

if __name__ == "__main__":
    # small but TPU-layout-friendly shapes (Dh=64 so 2 heads = 128 lanes)
    B, S = 2, 16
    D_MODEL, N_HEADS, D_FF, N_LAYERS = 128, 2, 512, 2
    VOCAB, TYPE_VOCAB, MAX_POS = 64, 2, 32

    key = jax.random.PRNGKey(0)
    k_param, k_ids, k_typ = jax.random.split(key, 3)

    params = make_params(
        k_param, vocab_size=VOCAB, type_vocab_size=TYPE_VOCAB,
        max_pos=MAX_POS, d_model=D_MODEL, n_layers=N_LAYERS,
        n_heads=N_HEADS, d_ff=D_FF, num_classes=2)

    input_ids = jax.random.randint(k_ids, (B, S), 0, VOCAB, dtype=jnp.int32)
    token_type_ids = jax.random.randint(k_typ, (B, S), 0, TYPE_VOCAB,
                                        dtype=jnp.int32)
    attn_mask = jnp.ones((B, S), dtype=jnp.int32)

    start_logits, end_logits = bert_qa_forward(
        params, input_ids, token_type_ids, attn_mask,
        is_causal=False, n_heads=N_HEADS)

    jax.block_until_ready((start_logits, end_logits))
    assert start_logits.shape == (B, S) and end_logits.shape == (B, S)
    assert bool(jnp.all(jnp.isfinite(start_logits)))
    assert bool(jnp.all(jnp.isfinite(end_logits)))
    print("KERNEL_OK")
</pallas_src>

<mosaic_0001>
module attributes {stable_mosaic.version = 11 : i64} {
  func.func @_embed_ln_kernel(%arg0: i32, %arg1: i32, %arg2: memref<16x128xf32, #tpu.memory_space<vmem>>, %arg3: memref<16x128xf32, #tpu.memory_space<vmem>>, %arg4: memref<16x128xf32, #tpu.memory_space<vmem>>, %arg5: memref<1x128xf32, #tpu.memory_space<vmem>>, %arg6: memref<1x128xf32, #tpu.memory_space<vmem>>, %arg7: memref<16x128xbf16, #tpu.memory_space<vmem>>) attributes {dimension_semantics = [#tpu.dimension_semantics<parallel>, #tpu.dimension_semantics<parallel>], iteration_bounds = array<i64: 2, 1>, scalar_prefetch = 0 : i64, scratch_operands = 0 : i64, tpu.core_type = #tpu.core_type<tc>, window_params = [{transform_indices = @transform_0, window_bounds = array<i64: 16, 128>}, {transform_indices = @transform_1, window_bounds = array<i64: 16, 128>}, {transform_indices = @transform_2, window_bounds = array<i64: 16, 128>}, {pipeline_mode = #tpu.pipeline_mode<synchronous>, transform_indices = @transform_3, window_bounds = array<i64: 1, 128>}, {pipeline_mode = #tpu.pipeline_mode<synchronous>, transform_indices = @transform_4, window_bounds = array<i64: 1, 128>}, {transform_indices = @transform_5, window_bounds = array<i64: 16, 128>}]} {
    %c0 = arith.constant 0 : index
    %c0_0 = arith.constant 0 : index
    %0 = vector.load %arg2[%c0, %c0_0] : memref<16x128xf32, #tpu.memory_space<vmem>>, vector<16x128xf32>
    %c0_1 = arith.constant 0 : index
    %c0_2 = arith.constant 0 : index
    %1 = vector.load %arg3[%c0_1, %c0_2] : memref<16x128xf32, #tpu.memory_space<vmem>>, vector<16x128xf32>
    %2 = arith.addf %0, %1 : vector<16x128xf32>
    %c0_3 = arith.constant 0 : index
    %c0_4 = arith.constant 0 : index
    %3 = vector.load %arg4[%c0_3, %c0_4] : memref<16x128xf32, #tpu.memory_space<vmem>>, vector<16x128xf32>
    %4 = arith.addf %2, %3 : vector<16x128xf32>
    %cst = arith.constant dense<0.000000e+00> : vector<16xf32>
    %5 = vector.multi_reduction <add>, %4, %cst [1] : vector<16x128xf32> to vector<16xf32>
    %6 = vector.shape_cast %5 : vector<16xf32> to vector<16x1xf32>
    %cst_5 = arith.constant 1.280000e+02 : f32
    %7 = vector.broadcast %cst_5 : f32 to vector<16x1xf32>
    %8 = arith.divf %6, %7 : vector<16x1xf32>
    %9 = vector.broadcast %8 : vector<16x1xf32> to vector<16x128xf32>
    %10 = arith.subf %4, %9 : vector<16x128xf32>
    %11 = arith.mulf %10, %10 : vector<16x128xf32>
    %cst_6 = arith.constant dense<0.000000e+00> : vector<16xf32>
    %12 = vector.multi_reduction <add>, %11, %cst_6 [1] : vector<16x128xf32> to vector<16xf32>
    %13 = vector.shape_cast %12 : vector<16xf32> to vector<16x1xf32>
    %cst_7 = arith.constant 1.280000e+02 : f32
    %14 = vector.broadcast %cst_7 : f32 to vector<16x1xf32>
    %15 = arith.divf %13, %14 : vector<16x1xf32>
    %16 = vector.broadcast %8 : vector<16x1xf32> to vector<16x128xf32>
    %17 = arith.subf %4, %16 : vector<16x128xf32>
    %cst_8 = arith.constant 9.99999996E-13 : f32
    %18 = vector.broadcast %cst_8 : f32 to vector<16x1xf32>
    %19 = arith.addf %15, %18 : vector<16x1xf32>
    %20 = math.rsqrt %19 : vector<16x1xf32>
    %21 = vector.broadcast %20 : vector<16x1xf32> to vector<16x128xf32>
    %22 = arith.mulf %17, %21 : vector<16x128xf32>
    %c0_9 = arith.constant 0 : index
    %c0_10 = arith.constant 0 : index
    %23 = vector.load %arg5[%c0_9, %c0_10] : memref<1x128xf32, #tpu.memory_space<vmem>>, vector<1x128xf32>
    %24 = vector.broadcast %23 : vector<1x128xf32> to vector<16x128xf32>
    %25 = arith.mulf %22, %24 : vector<16x128xf32>
    %c0_11 = arith.constant 0 : index
    %c0_12 = arith.constant 0 : index
    %26 = vector.load %arg6[%c0_11, %c0_12] : memref<1x128xf32, #tpu.memory_space<vmem>>, vector<1x128xf32>
    %27 = vector.broadcast %26 : vector<1x128xf32> to vector<16x128xf32>
    %28 = arith.addf %25, %27 : vector<16x128xf32>
    %29 = arith.truncf %28 : vector<16x128xf32> to vector<16x128xbf16>
    %c0_13 = arith.constant 0 : index
    %c0_14 = arith.constant 0 : index
    %30 = vector.load %arg7[%c0_13, %c0_14] : memref<16x128xbf16, #tpu.memory_space<vmem>>, vector<16x128xbf16>
    tpu.vector_store %arg7[%c0_13, %c0_14], %29 {strides = array<i32>} : memref<16x128xbf16, #tpu.memory_space<vmem>>, vector<16x128xbf16>,
    return
  }
  func.func @transform_0(%arg0: i32, %arg1: i32) -> (i32, i32) {
    %c1_i32 = arith.constant 1 : i32
    %0 = arith.muli %arg0, %c1_i32 : i32
    %1 = arith.addi %0, %arg1 : i32
    %c0_i32 = arith.constant 0 : i32
    %c0_i32_0 = arith.constant 0 : i32
    return %1, %c0_i32 : i32, i32
  }
  func.func @transform_1(%arg0: i32, %arg1: i32) -> (i32, i32) {
    %c1_i32 = arith.constant 1 : i32
    %0 = arith.muli %arg0, %c1_i32 : i32
    %1 = arith.addi %0, %arg1 : i32
    %c0_i32 = arith.constant 0 : i32
    %c0_i32_0 = arith.constant 0 : i32
    return %1, %c0_i32 : i32, i32
  }
  func.func @transform_2(%arg0: i32, %arg1: i32) -> (i32, i32) {
    %c0_i32 = arith.constant 0 : i32
    %c0_i32_0 = arith.constant 0 : i32
    return %arg1, %c0_i32 : i32, i32
  }
  func.func @transform_3(%arg0: i32, %arg1: i32) -> (i32, i32) {
    %c0_i32 = arith.constant 0 : i32
    %c0_i32_0 = arith.constant 0 : i32
    %c0_i32_1 = arith.constant 0 : i32
    return %c0_i32, %c0_i32_0 : i32, i32
  }
  func.func @transform_4(%arg0: i32, %arg1: i32) -> (i32, i32) {
    %c0_i32 = arith.constant 0 : i32
    %c0_i32_0 = arith.constant 0 : i32
    %c0_i32_1 = arith.constant 0 : i32
    return %c0_i32, %c0_i32_0 : i32, i32
  }
  func.func @transform_5(%arg0: i32, %arg1: i32) -> (i32, i32) {
    %c1_i32 = arith.constant 1 : i32
    %0 = arith.muli %arg0, %c1_i32 : i32
    %1 = arith.addi %0, %arg1 : i32
    %c0_i32 = arith.constant 0 : i32
    %c0_i32_0 = arith.constant 0 : i32
    return %1, %c0_i32 : i32, i32
  }
}

</mosaic_0001>

<llo_original>
// kernel: tpu_custom_call.1
$region0: #{tpu_custom_call.1}
  #allocation0 [shape = 'u32[]', space=smem, size = 0x4, offset = 0x4, fixed_abs, tag = 'smem constant byte address 0x4 - core index']
  #allocation1 [shape = 'u32[144,128]{1,0:T(1,128)}', space=vmem, size = 0x12000, scoped, tag = 'internal scratch']
  %s0 = inlined_call_operand.hbm [shape: f32[32,128], index: 0, kind: input, shape index: {}]
  %s1 = inlined_call_operand.hbm [shape: f32[32,128], index: 1, kind: input, shape index: {}]
  %s2 = inlined_call_operand.hbm [shape: f32[16,128], index: 2, kind: input, shape index: {}]
  %s3 = inlined_call_operand.vmem [shape: f32[1,128], index: 3, kind: input, shape index: {}]
  %s4 = inlined_call_operand.vmem [shape: f32[1,128], index: 4, kind: input, shape index: {}]
  %s5 = inlined_call_operand.hbm [shape: bf16[32,128], index: 5, kind: output, shape index: {}]
  %s6 = sld [smem:[#allocation0]]
  $region65: #{tpu_custom_call.1} parent=0
    _
  %s8 = ssub.s32 1, %s6
  %s9 = scalar_select 0, %s8, %s6
  $region1: #{tpu_custom_call.1} parent=0
    #allocation2 [shape = 'u8[16384]{0}', space=vmem, size = 0x4000, scoped, tag = 'input window, operand 0']
    #allocation3 [shape = 's32[2]{0}', space=sflag, size = 0x8, scoped, tag = 'scoped memory for tpu_custom_call.1']
    #allocation4 [shape = 's32[2]{0}', space=sflag, size = 0x8, scoped, tag = 'scoped memory for tpu_custom_call.1']
    #allocation5 [shape = 'u8[16384]{0}', space=vmem, size = 0x4000, scoped, tag = 'input window, operand 1']
    #allocation6 [shape = 's32[2]{0}', space=sflag, size = 0x8, scoped, tag = 'scoped memory for tpu_custom_call.1']
    #allocation7 [shape = 'u8[8192]{0}', space=vmem, size = 0x2000, scoped, tag = 'input window, operand 2, single buffered']
    #allocation8 [shape = 'u8[8192]{0}', space=vmem, size = 0x2000, scoped, tag = 'output window, operand 0']
    %10 = vsyncpa [#allocation3], 0
    %s11 = scalar_lea.sflag [#allocation3], 1
    %12 = vsyncpa %s11, 0
    %13 = vsyncpa [#allocation6], 0
    %s14 = scalar_lea.sflag [#allocation6], 1
    %15 = vsyncpa %s14, 0
    %16 = vsyncpa [#allocation4], 0
    %s17 = scalar_lea.sflag [#allocation4], 1
    %18 = vsyncpa %s17, 0
    loop: start=0, step=1, limit=4
    $region2: #{tpu_custom_call.1} parent=1 // loop_pre_header
      _
    $region3: #{tpu_custom_call.1} parent=1 // loop_header
      %s20 = sphi 0, %s24
      %p21 = scmp.ge.s32.totalorder %s20, 4
      %s27 = sphi 0, %s39
      %s28 = sphi 0, %s35
      %s29 = sphi 0, %s27
      %s30 = sphi 0, %s28
      %s31 = sphi 0, %s29
      %s32 = sphi 0, %s30
      %s44 = sphi 0, %s46
      %s47 = sphi 0, %s44
      %s48 = sphi 0, %s47
      %s64 = sphi 0, %s48
      %s72 = sphi 0, %s74
      %s75 = sphi 0, %s72
      %s76 = sphi 0, %s75
      %s92 = sphi 0, %s76
      %s98 = sphi 0, %s100
      %s101 = sphi 0, %s98
      %s102 = sphi 0, %s101
      %s118 = sphi 0, %s102
      %s122 = sphi 0, %s122
      %s124 = sphi 0, %s122
      %s125 = sphi 0, %s124
      %s139 = sphi 0, %s125
      %s143 = sphi 0, %s143
      %s145 = sphi 0, %s143
      %s146 = sphi 0, %s145
      %s160 = sphi 0, %s146
      %s168 = sphi 0, %s170
      %s171 = sphi 0, %s168
      %s172 = sphi 0, %s171
      %s188 = sphi 0, %s172
    $region4: #{tpu_custom_call.1} parent=1 // loop_header_branch
      %23 = sbr.rel (%p21) target = $region8
    $region5: #{tpu_custom_call.1} parent=1 // loop_body
      %s25 = ssub.s32 %s20, 1
      %s26 = ssub.s32 %s20, 2
      %s33 = sadd.s32 1, %s28
      %p34 = scmp.ge.s32.totalorder %s33, 1
      %s35 = scalar_select %p34, 0, %s33
      %s36 = sadd.s32 1, %s27
      %s37 = scalar_select %p34, %s36, %s27
      %p38 = scmp.ge.s32.totalorder %s37, 2
      %s39 = scalar_select %p38, 0, %s37
      %s40 = sadd.s32 %s27, %s28
      %s41 = sadd.s32 %s39, %s35
      %s42 = ssub.s32 %s40, %s41
      %p43 = scmp.eq.s32.totalorder %s42, 0
      %s45 = sadd.s32 %s44, 1
      %s46 = scalar_select %p43, %s44, %s45
      %p49 = pneg %p43
      %p50 = scmp.eq.s32.totalorder %s20, 1
      %p51 = por %p49, %p50
      %p52 = scmp.ne.s32.totalorder %s44, %s47
      %p53 = scmp.eq.s32.totalorder %s20, 0
      %p54 = por %p52, %p53
      %p55 = scmp.ne.s32.totalorder %s44, %s47
      %p56 = scmp.eq.s32.totalorder %s25, 1
      %p57 = por %p55, %p56
      %p58 = scmp.ne.s32.totalorder %s47, %s48
      %p59 = scmp.eq.s32.totalorder %s25, 0
      %p60 = por %p58, %p59
      %p61 = scmp.ne.s32.totalorder %s47, %s48
      %p62 = scmp.eq.s32.totalorder %s26, 1
      %p63 = por %p61, %p62
      %p65 = scmp.ne.s32.totalorder %s48, %s64
      %p66 = scmp.eq.s32.totalorder %s26, 0
      %p67 = por %p65, %p66
      %s68 = sadd.s32 %s27, %s28
      %s69 = sadd.s32 %s39, %s35
      %s70 = ssub.s32 %s68, %s69
      %p71 = scmp.eq.s32.totalorder %s70, 0
      %s73 = sadd.s32 %s72, 1
      %s74 = scalar_select %p71, %s72, %s73
      %p77 = pneg %p71
      %p78 = scmp.eq.s32.totalorder %s20, 1
      %p79 = por %p77, %p78
      %p80 = scmp.ne.s32.totalorder %s72, %s75
      %p81 = scmp.eq.s32.totalorder %s20, 0
      %p82 = por %p80, %p81
      %p83 = scmp.ne.s32.totalorder %s72, %s75
      %p84 = scmp.eq.s32.totalorder %s25, 1
      %p85 = por %p83, %p84
      %p86 = scmp.ne.s32.totalorder %s75, %s76
      %p87 = scmp.eq.s32.totalorder %s25, 0
      %p88 = por %p86, %p87
      %p89 = scmp.ne.s32.totalorder %s75, %s76
      %p90 = scmp.eq.s32.totalorder %s26, 1
      %p91 = por %p89, %p90
      %p93 = scmp.ne.s32.totalorder %s76, %s92
      %p94 = scmp.eq.s32.totalorder %s26, 0
      %p95 = por %p93, %p94
      %s96 = ssub.s32 %s28, %s35
      %p97 = scmp.eq.s32.totalorder %s96, 0
      %s99 = sadd.s32 %s98, 1
      %s100 = scalar_select %p97, %s98, %s99
      %p103 = pneg %p97
      %p104 = scmp.eq.s32.totalorder %s20, 1
      %p105 = por %p103, %p104
      %p106 = scmp.ne.s32.totalorder %s98, %s101
      %p107 = scmp.eq.s32.totalorder %s20, 0
      %p108 = por %p106, %p107
      %p109 = scmp.ne.s32.totalorder %s98, %s101
      %p110 = scmp.eq.s32.totalorder %s25, 1
      %p111 = por %p109, %p110
      %p112 = scmp.ne.s32.totalorder %s101, %s102
      %p113 = scmp.eq.s32.totalorder %s25, 0
      %p114 = por %p112, %p113
      %p115 = scmp.ne.s32.totalorder %s101, %s102
      %p116 = scmp.eq.s32.totalorder %s26, 1
      %p117 = por %p115, %p116
      %p119 = scmp.ne.s32.totalorder %s102, %s118
      %p120 = scmp.eq.s32.totalorder %s26, 0
      %p121 = por %p119, %p120
      %s123 = sadd.s32 %s122, 1
      %p126 = scmp.eq.s32.totalorder %s20, 1
      %p127 = scmp.ne.s32.totalorder %s122, %s124
      %p128 = scmp.eq.s32.totalorder %s20, 0
      %p129 = por %p127, %p128
      %p130 = scmp.ne.s32.totalorder %s122, %s124
      %p131 = scmp.eq.s32.totalorder %s25, 1
      %p132 = por %p130, %p131
      %p133 = scmp.ne.s32.totalorder %s124, %s125
      %p134 = scmp.eq.s32.totalorder %s25, 0
      %p135 = por %p133, %p134
      %p136 = scmp.ne.s32.totalorder %s124, %s125
      %p137 = scmp.eq.s32.totalorder %s26, 1
      %p138 = por %p136, %p137
      %p140 = scmp.ne.s32.totalorder %s125, %s139
      %p141 = scmp.eq.s32.totalorder %s26, 0
      %p142 = por %p140, %p141
      %s144 = sadd.s32 %s143, 1
      %p147 = scmp.eq.s32.totalorder %s20, 1
      %p148 = scmp.ne.s32.totalorder %s143, %s145
      %p149 = scmp.eq.s32.totalorder %s20, 0
      %p150 = por %p148, %p149
      %p151 = scmp.ne.s32.totalorder %s143, %s145
      %p152 = scmp.eq.s32.totalorder %s25, 1
      %p153 = por %p151, %p152
      %p154 = scmp.ne.s32.totalorder %s145, %s146
      %p155 = scmp.eq.s32.totalorder %s25, 0
      %p156 = por %p154, %p155
      %p157 = scmp.ne.s32.totalorder %s145, %s146
      %p158 = scmp.eq.s32.totalorder %s26, 1
      %p159 = por %p157, %p158
      %p161 = scmp.ne.s32.totalorder %s146, %s160
      %p162 = scmp.eq.s32.totalorder %s26, 0
      %p163 = por %p161, %p162
      %s164 = sadd.s32 %s27, %s28
      %s165 = sadd.s32 %s39, %s35
      %s166 = ssub.s32 %s164, %s165
      %p167 = scmp.eq.s32.totalorder %s166, 0
      %s169 = sadd.s32 %s168, 1
      %s170 = scalar_select %p167, %s168, %s169
      %p173 = pneg %p167
      %p174 = scmp.eq.s32.totalorder %s20, 1
      %p175 = por %p173, %p174
      %p176 = scmp.ne.s32.totalorder %s168, %s171
      %p177 = scmp.eq.s32.totalorder %s20, 0
      %p178 = por %p176, %p177
      %p179 = scmp.ne.s32.totalorder %s168, %s171
      %p180 = scmp.eq.s32.totalorder %s25, 1
      %p181 = por %p179, %p180
      %p182 = scmp.ne.s32.totalorder %s171, %s172
      %p183 = scmp.eq.s32.totalorder %s25, 0
      %p184 = por %p182, %p183
      %p185 = scmp.ne.s32.totalorder %s171, %s172
      %p186 = scmp.eq.s32.totalorder %s26, 1
      %p187 = por %p185, %p186
      %p189 = scmp.ne.s32.totalorder %s172, %s188
      %p190 = scmp.eq.s32.totalorder %s26, 0
      %p191 = por %p189, %p190
      %p192 = scmp.le.s32.totalorder 1, %s20
      %p193 = scmp.lt.s32.totalorder %s20, 3
      %p194 = pnand %p192, %p193
      %p195 = pneg %p194
      // Predicated region
      $region9: #{tpu_custom_call.1} parent=5 // pred_check
        _
      $region10: #{tpu_custom_call.1} parent=5 // pred_check_branch
        %197 = sbr.rel (%p194) target = $region12
      $region11: #{tpu_custom_call.1} parent=5 // pred_region
        %s198 = ssub.s32 %s20, 1
        // Predicated region
        $region13: #{tpu_custom_call.1} parent=11 // pred_check
          %p199 = pneg %p114
        $region14: #{tpu_custom_call.1} parent=11 // pred_check_branch
          %201 = sbr.rel (%p199) target = $region16
        $region15: #{tpu_custom_call.1} parent=11 // pred_region
          %s202 = smul.u32 2, %s30
          %s204 = ssub.s32 256, 256
          %205 = vsyncadd [#allocation6], %s204
          %s206 = smul.addr %s202, 128
          %s207 = scalar_lea.hbm %s2, %s206
          %s208 = sshll.u32 [#allocation7], 4
          %s209 = int_to_ptr.vmem [resolvable:$true] %s208
          %214 = dma.hbm_to_vmem [thread:$0]  %s207, 256, %s209, [#allocation6], 128, 128, 8
        $region16: #{tpu_custom_call.1} parent=11 // pred_fallthru
          _
        // Predicated region
        $region17: #{tpu_custom_call.1} parent=11 // pred_check
          %p215 = pneg %p135
        $region18: #{tpu_custom_call.1} parent=11 // pred_check_branch
          %217 = sbr.rel (%p215) target = $region20
        $region19: #{tpu_custom_call.1} parent=11 // pred_region
          _
        $region20: #{tpu_custom_call.1} parent=11 // pred_fallthru
          _
        // Predicated region
        $region21: #{tpu_custom_call.1} parent=11 // pred_check
          %p218 = pneg %p156
        $region22: #{tpu_custom_call.1} parent=11 // pred_check_branch
          %220 = sbr.rel (%p218) target = $region24
        $region23: #{tpu_custom_call.1} parent=11 // pred_region
          _
        $region24: #{tpu_custom_call.1} parent=11 // pred_fallthru
          _
      $region12: #{tpu_custom_call.1} parent=5 // pred_fallthru
        _
      %p221 = scmp.lt.s32.totalorder %s20, 2
      // Predicated region
      $region25: #{tpu_custom_call.1} parent=5 // pred_check
        %p222 = pneg %p221
      $region26: #{tpu_custom_call.1} parent=5 // pred_check_branch
        %224 = sbr.rel (%p222) target = $region28
      $region27: #{tpu_custom_call.1} parent=5 // pred_region
        // Predicated region
        $region29: #{tpu_custom_call.1} parent=27 // pred_check
          %p225 = pneg %p54
        $region30: #{tpu_custom_call.1} parent=27 // pred_check_branch
          %227 = sbr.rel (%p225) target = $region32
        $region31: #{tpu_custom_call.1} parent=27 // pred_region
          %s228 = sand.u32 %s44, 1
          %s229 = scalar_lea.sflag [#allocation3], %s228
          %s230 = sand.u32 %s44, 1
          %s231 = smul.addr %s230, 16
          %s232 = scalar_lea.vmem [#allocation2], %s231
          %s233 = sadd.s32 %s27, %s28
          %s234 = smul.u32 2, %s233
          %s236 = ssub.s32 256, 256
          %237 = vsyncadd %s229, %s236
          %s238 = smul.addr %s234, 128
          %s239 = scalar_lea.hbm %s0, %s238
          %s240 = sshll.u32 %s232, 4
          %s241 = int_to_ptr.vmem [resolvable:$true] %s240
          %246 = dma.hbm_to_vmem [thread:$0]  %s239, 256, %s241, %s229, 128, 128, 8
        $region32: #{tpu_custom_call.1} parent=27 // pred_fallthru
          _
        // Predicated region
        $region33: #{tpu_custom_call.1} parent=27 // pred_check
          %p247 = pneg %p82
        $region34: #{tpu_custom_call.1} parent=27 // pred_check_branch
          %249 = sbr.rel (%p247) target = $region36
        $region35: #{tpu_custom_call.1} parent=27 // pred_region
          %s250 = sand.u32 %s20, 1
          %s251 = scalar_lea.sflag [#allocation6], %s250
          %s252 = sand.u32 %s72, 1
          %s253 = smul.addr %s252, 16
          %s254 = scalar_lea.vmem [#allocation5], %s253
          %s255 = sadd.s32 %s27, %s28
          %s256 = smul.u32 2, %s255
          %s258 = ssub.s32 256, 256
          %259 = vsyncadd %s251, %s258
          %s260 = smul.addr %s256, 128
          %s261 = scalar_lea.hbm %s1, %s260
          %s262 = sshll.u32 %s254, 4
          %s263 = int_to_ptr.vmem [resolvable:$true] %s262
          %268 = dma.hbm_to_vmem [thread:$0]  %s261, 256, %s263, %s251, 128, 128, 8
        $region36: #{tpu_custom_call.1} parent=27 // pred_fallthru
          _
      $region28: #{tpu_custom_call.1} parent=5 // pred_fallthru
        _
      %p269 = scmp.le.s32.totalorder 1, %s20
      %p270 = scmp.lt.s32.totalorder %s20, 3
      %p271 = pnand %p269, %p270
      %p272 = pneg %p271
      // Predicated region
      $region37: #{tpu_custom_call.1} parent=5 // pred_check
        _
      $region38: #{tpu_custom_call.1} parent=5 // pred_check_branch
        %274 = sbr.rel (%p271) target = $region40
      $region39: #{tpu_custom_call.1} parent=5 // pred_region
        %s275 = ssub.s32 %s20, 1
        %s276 = sand.u32 %s47, 1
        %s277 = scalar_lea.sflag [#allocation3], %s276
        %s278 = sand.u32 %s47, 1
        %s279 = smul.addr %s278, 16
        %s280 = scalar_lea.vmem [#allocation2], %s279
        // Predicated region
        $region41: #{tpu_custom_call.1} parent=39 // pred_check
          %p281 = pneg %p60
        $region42: #{tpu_custom_call.1} parent=39 // pred_check_branch
          %283 = sbr.rel (%p281) target = $region44
        $region43: #{tpu_custom_call.1} parent=39 // pred_region
          %284 = dma.done %s277, 256
        $region44: #{tpu_custom_call.1} parent=39 // pred_fallthru
          _
        %s285 = sand.u32 %s25, 1
        %s286 = scalar_lea.sflag [#allocation6], %s285
        %s287 = sand.u32 %s75, 1
        %s288 = smul.addr %s287, 16
        %s289 = scalar_lea.vmem [#allocation5], %s288
        // Predicated region
        $region45: #{tpu_custom_call.1} parent=39 // pred_check
          %p290 = pneg %p88
        $region46: #{tpu_custom_call.1} parent=39 // pred_check_branch
          %292 = sbr.rel (%p290) target = $region48
        $region47: #{tpu_custom_call.1} parent=39 // pred_region
          %293 = dma.done %s286, 256
        $region48: #{tpu_custom_call.1} parent=39 // pred_fallthru
          _
        // Predicated region
        $region49: #{tpu_custom_call.1} parent=39 // pred_check
          %p294 = pneg %p114
        $region50: #{tpu_custom_call.1} parent=39 // pred_check_branch
          %296 = sbr.rel (%p294) target = $region52
        $region51: #{tpu_custom_call.1} parent=39 // pred_region
          %297 = dma.done [#allocation6], 256
        $region52: #{tpu_custom_call.1} parent=39 // pred_fallthru
          _
        %s298 = sand.u32 %s47, 1
        %s299 = scalar_lea.sflag [#allocation3], %s298
        %s300 = sand.u32 %s47, 1
        %s301 = smul.addr %s300, 16
        %s302 = scalar_lea.vmem [#allocation2], %s301
        %p303 = pneg %p60
        %p304 = pneg %p57
        %s305 = sand.u32 %s25, 1
        %s306 = scalar_lea.sflag [#allocation6], %s305
        %s307 = sand.u32 %s75, 1
        %s308 = smul.addr %s307, 16
        %s309 = scalar_lea.vmem [#allocation5], %s308
        %p310 = pneg %p88
        %p311 = pneg %p85
        %p312 = pneg %p114
        %p313 = pneg %p111
        %p314 = pneg %p135
        %p315 = pneg %p132
        %p316 = pneg %p156
        %p317 = pneg %p153
        %p318 = pneg %p184
        %p319 = pneg %p181
        %s320 = sand.u32 %s171, 1
        %s321 = scalar_lea.sflag [#allocation4], %s320
        %s322 = sand.u32 %s171, 1
        %s323 = smul.addr %s322, 8
        %s324 = scalar_lea.vmem [#allocation8], %s323
        %s325 = sadd.s32 %s29, %s30
        %s326 = smul.u32 2, %s325
        %s327 = sadd.s32 %s29, %s30
        %s328 = smul.u32 2, %s327
        %s329 = smul.u32 2, %s30
        %s330 = sadd.s32 %s29, %s30
        %s331 = smul.u32 2, %s330
        %v332 = vld [vmem:[%s280] sm:$0xff]
        %v333 = vld [vmem:[%s280 + $0x8] sm:$0xff]
        %v334 = vld [vmem:[%s289] sm:$0xff]
        %v335 = vld [vmem:[%s289 + $0x8] sm:$0xff]
        %v336 = vadd.f32 %v332, %v334
        %v337 = vadd.f32 %v333, %v335
        %v338 = vld [vmem:[#allocation7] sm:$0xff]
        %v339 = vld [vmem:[#allocation7 + $0x8] sm:$0xff]
        %v340 = vadd.f32 %v336, %v338
        %v341 = vadd.f32 %v337, %v339
        %342 = vadd.xlane.f32.xlu0 %v340
        %v343 = vpop.xlane.xlu0 %342
        %344 = vadd.xlane.f32.xlu0 %v341
        %v345 = vpop.xlane.xlu0 %344
        %v346 = vrcp.pop 128.0
        %v347 = vmul.f32 %v343, %v346
        %v348 = vmul.f32 %v345, %v346
        %v349 = vsub.f32 %v340, %v347
        %v350 = vsub.f32 %v341, %v348
        %v351 = vmul.f32 %v349, %v349
        %v352 = vmul.f32 %v350, %v350
        %353 = vadd.xlane.f32.xlu0 %v351
        %v354 = vpop.xlane.xlu0 %353
        %355 = vadd.xlane.f32.xlu0 %v352
        %v356 = vpop.xlane.xlu0 %355
        %v357 = vmul.f32 %v354, %v346
        %v358 = vmul.f32 %v356, %v346
        %v359 = vadd.f32 %v357, 1e-12
        %v360 = vadd.f32 %v358, 1e-12
        %v361 = vrsqrt.pop %v359
        %v362 = vrsqrt.pop %v360
        %v363 = vmul.f32 %v349, %v361
        %v364 = vmul.f32 %v350, %v362
        %v365 = vld [vmem:[%s3] sm:$0x1]
        %v367 = vlaneseq
        %v368 = vshrl.u32 %v367, 7
        %v369 = vsub.s32 0, %v368
        %v370 = vrot.slane %v365, %v369
        %v372 = vmul.f32 %v363, %v370
        %v373 = vmul.f32 %v364, %v370
        %v374 = vld [vmem:[%s4] sm:$0x1]
        %v376 = vlaneseq
        %v377 = vshrl.u32 %v376, 7
        %v378 = vsub.s32 0, %v377
        %v379 = vrot.slane %v374, %v378
        %v381 = vadd.f32 %v372, %v379
        %v382 = vadd.f32 %v373, %v379
        %v383 = vpack.c.bf16 %v382, %v381
        %v385 = vunpack.c.l.b16 %v383
        %v386 = vunpack.c.h.b16 %v383
        %v387 = vpack.c.b16 %v385, %v385
        %v388 = vpack.c.b16 %v386, %v386
        %391 = vst [vmem:[%s324] sm:$0xf] %v387
        %392 = vst [vmem:[%s324 + $0x4] sm:$0xf] %v388
        %s393 = sand.u32 %s171, 1
        %s394 = scalar_lea.sflag [#allocation4], %s393
        %s395 = sand.u32 %s171, 1
        %s396 = smul.addr %s395, 8
        %s397 = scalar_lea.vmem [#allocation8], %s396
        // Predicated region
        $region53: #{tpu_custom_call.1} parent=39 // pred_check
          %p398 = pneg %p181
        $region54: #{tpu_custom_call.1} parent=39 // pred_check_branch
          %400 = sbr.rel (%p398) target = $region56
        $region55: #{tpu_custom_call.1} parent=39 // pred_region
          %s401 = sadd.s32 %s29, %s30
          %s402 = smul.u32 2, %s401
          %s404 = ssub.s32 128, 128
          %405 = vsyncadd %s394, %s404
          %s406 = smul.addr %s402, 64
          %s407 = scalar_lea.hbm %s5, %s406
          %s408 = sshll.u32 %s397, 4
          %s409 = int_to_ptr.vmem [resolvable:$true] %s408
          %414 = dma.vmem_to_hbm [thread:$0]  %s409, 128, %s407, %s394, 64, 64, 4
        $region56: #{tpu_custom_call.1} parent=39 // pred_fallthru
          _
      $region40: #{tpu_custom_call.1} parent=5 // pred_fallthru
        _
      %p415 = scmp.le.s32.totalorder 2, %s20
      // Predicated region
      $region57: #{tpu_custom_call.1} parent=5 // pred_check
        %p416 = pneg %p415
      $region58: #{tpu_custom_call.1} parent=5 // pred_check_branch
        %418 = sbr.rel (%p416) target = $region60
      $region59: #{tpu_custom_call.1} parent=5 // pred_region
        %s419 = ssub.s32 %s20, 2
        // Predicated region
        $region61: #{tpu_custom_call.1} parent=59 // pred_check
          %p420 = pneg %p187
        $region62: #{tpu_custom_call.1} parent=59 // pred_check_branch
          %422 = sbr.rel (%p420) target = $region64
        $region63: #{tpu_custom_call.1} parent=59 // pred_region
          %s423 = sand.u32 %s172, 1
          %s424 = scalar_lea.sflag [#allocation4], %s423
          %s425 = sand.u32 %s172, 1
          %s426 = smul.addr %s425, 8
          %s427 = scalar_lea.vmem [#allocation8], %s426
          %428 = dma.done %s424, 128
        $region64: #{tpu_custom_call.1} parent=59 // pred_fallthru
          _
      $region60: #{tpu_custom_call.1} parent=5 // pred_fallthru
        _
    $region6: #{tpu_custom_call.1} parent=1 // loop_footer
      %s24 = sadd.s32 1, %s20
    $region7: #{tpu_custom_call.1} parent=1 // loop_footer_branch
      %19 = sbr.rel target = $region3
    $region8: #{tpu_custom_call.1} parent=1 // loop_exit
      _
    %429 = vsyncpa [#allocation3], 1
    %s430 = scalar_lea.sflag [#allocation3], 1
    %431 = vsyncpa %s430, 1
    %432 = vsyncpa [#allocation6], 1
    %s433 = scalar_lea.sflag [#allocation6], 1
    %434 = vsyncpa %s433, 1
    %435 = vsyncpa [#allocation4], 1
    %s436 = scalar_lea.sflag [#allocation4], 1
    %437 = vsyncpa %s436, 1

</llo_original>
